<compile_context>
chip_gen: v6e
topology: v6e:2x2x1
jax: 0.10.0
libtpu: 0.0.40
codegen_flags: <defaults>
</compile_context>

<pallas_src>
import jax
import jax.numpy as jnp
from jax.experimental import pallas as pl
from jax.experimental.pallas import tpu as pltpu

LANE = 128
SUBLANE = 8


def _round_up(x, m):
    return (x + m - 1) // m * m


def _vmem_limit_bytes():
    phys = 64 * 1024 * 1024  # conservative fallback (v7x per-TensorCore VMEM)
    try:
        phys = int(pltpu.get_tpu_info().vmem_capacity_bytes)
    except Exception:
        pass
    # Leave headroom for Mosaic-internal scratch; cap well below physical.
    return max(32 * 1024 * 1024, min(phys * 3 // 4, 96 * 1024 * 1024))


def _phase1_vmem_bytes(tile_m, tile_k, cpad, interm_bytes):
    return (2 * tile_m * tile_k * 2              # patches, double-buffered bf16
            + 2 * tile_k * cpad * 2              # weights, double-buffered bf16
            + 2 * tile_m * cpad * interm_bytes   # conv output blocks
            + tile_m * cpad * 4                  # f32 accumulator scratch
            + 4 * SUBLANE * cpad * 4)            # per-tile stats blocks (tiny)


def _choose_tiles(M, Kpad, Cpad, budget, interm_bytes, want_tile_m):
    """Pick (tile_m, tile_k) fitting `budget` bytes of VMEM, tile_k | Kpad."""
    tile_m = max(16, min(_round_up(want_tile_m, 16), _round_up(M, 16)))
    nkb = Kpad // LANE
    while True:
        for splits in range(1, nkb + 1):         # fewest K tiles that fit
            if nkb % splits:
                continue
            tile_k = (nkb // splits) * LANE
            if _phase1_vmem_bytes(tile_m, tile_k, Cpad, interm_bytes) <= budget:
                return tile_m, tile_k
        if tile_m <= 64:
            return tile_m, LANE                  # smallest sensible tiles
        tile_m = max(64, _round_up(tile_m // 2, 16))


def _conv_stats_kernel(p_ref, w_ref, conv_ref, sum_ref, ssq_ref, acc_ref):
    # p_ref:    (tile_m, tile_k)    bf16 im2col patch tile
    # w_ref:    (tile_k, Cpad)      bf16 weight tile
    # conv_ref: (tile_m, Cpad)      conv output tile (bf16), written at last k
    # sum_ref / ssq_ref: (1, 8, Cpad) f32 per-M-tile partial statistics
    # acc_ref:  (tile_m, Cpad)      f32 VMEM accumulator scratch
    k = pl.program_id(1)

    @pl.when(k == 0)
    def _():
        acc_ref[...] = jnp.zeros_like(acc_ref)

    acc_ref[...] += jnp.dot(p_ref[...], w_ref[...],
                            preferred_element_type=jnp.float32)

    @pl.when(k == pl.num_programs(1) - 1)
    def _():
        acc = acc_ref[...]
        conv_ref[...] = acc.astype(conv_ref.dtype)
        # Partial stats from the f32 accumulator (before the bf16 cast).
        s = jnp.sum(acc, axis=0, keepdims=True)          # (1, Cpad)
        q = jnp.sum(acc * acc, axis=0, keepdims=True)    # (1, Cpad)
        sum_ref[0] = jnp.broadcast_to(s, sum_ref.shape[1:])
        ssq_ref[0] = jnp.broadcast_to(q, ssq_ref.shape[1:])


def _bn_lrelu_kernel(conv_ref, scale_ref, shift_ref, out_ref):
    # Folded BN affine (one FMA per element) + LeakyReLU(0.2), lane-dense.
    y = conv_ref[...].astype(jnp.float32) * scale_ref[...] + shift_ref[...]
    out_ref[...] = jnp.where(y >= 0, y, 0.2 * y).astype(out_ref.dtype)


def dcgan_conv_forward(x, weight, bias, gamma, beta, *, eps=1e-5,
                       compute_dtype=jnp.bfloat16, interm_dtype=jnp.bfloat16,
                       out_dtype=None, input_format="NCHW", output_format=None,
                       want_tile_m=1024):
    """Conv2d(nin, nout, 4, 2, 1) + train-mode BatchNorm2d + LeakyReLU(0.2).

    `bias` is accepted for nn.Conv2d API parity but is exactly cancelled by
    the train-mode BatchNorm mean subtraction, so it is unused. Pass
    input_format/output_format="NHWC" when chaining layers to avoid the
    NCHW<->NHWC layout round trip; pass out_dtype=jnp.bfloat16 to halve the
    final store if the consumer tolerates it.
    """
    del bias  # cancelled by train-mode BN mean subtraction (see references)
    if output_format is None:
        output_format = input_format
    out_dtype = x.dtype if out_dtype is None else out_dtype

    # Early cast: everything downstream (im2col slab included) is bf16.
    x = x.astype(compute_dtype)
    if input_format == "NCHW":
        x = jnp.transpose(x, (0, 2, 3, 1))        # -> NHWC
    N, H, W, Cin = x.shape
    Cout = weight.shape[0]
    assert H % 2 == 0 and W % 2 == 0, "dcgan_conv expects even spatial dims"
    Hout, Wout = H // 2, W // 2
    M = N * Hout * Wout
    K = Cin * 16

    # im2col from the NHWC view: concat the 16 strided taps on the channel
    # (lane) axis; k index = (kh*4 + kw)*Cin + cin. Entirely in bf16.
    xp = jnp.pad(x, ((0, 0), (1, 1), (1, 1), (0, 0)))
    taps = [xp[:, kh:kh + 2 * Hout:2, kw:kw + 2 * Wout:2, :]
            for kh in range(4) for kw in range(4)]
    patches = jnp.concatenate(taps, axis=-1).reshape(M, K)
    w2d = jnp.transpose(weight, (2, 3, 1, 0)).reshape(K, Cout)

    # Lane/MXU-friendly padding (zeros are stats-neutral: we divide by true M).
    Kpad = _round_up(K, LANE)
    Cpad = _round_up(Cout, LANE)
    vmem_limit = _vmem_limit_bytes()
    interm_bytes = jnp.dtype(interm_dtype).itemsize
    tile_m, tile_k = _choose_tiles(M, Kpad, Cpad, budget=vmem_limit * 4 // 5,
                                   interm_bytes=interm_bytes,
                                   want_tile_m=want_tile_m)
    Mpad = _round_up(M, tile_m)
    num_m = Mpad // tile_m
    num_k = Kpad // tile_k

    patches = jnp.pad(patches, ((0, Mpad - M), (0, Kpad - K)))
    w2d = jnp.pad(w2d, ((0, Kpad - K), (0, Cpad - Cout))).astype(compute_dtype)
    gamma_p = jnp.pad(gamma.astype(jnp.float32), (0, Cpad - Cout),
                      constant_values=1.0).reshape(1, Cpad)
    beta_p = jnp.pad(beta.astype(jnp.float32), (0, Cpad - Cout)).reshape(1, Cpad)

    # Phase 1: K-tiled MXU matmul (f32 accumulate) -> bf16 conv slab +
    # per-M-tile partial channel statistics. M axis is "parallel" (2 TCs on
    # v7x); K axis is the "arbitrary" reduction axis, last in the grid.
    conv, psum, pssq = pl.pallas_call(
        _conv_stats_kernel,
        out_shape=(
            jax.ShapeDtypeStruct((Mpad, Cpad), interm_dtype),
            jax.ShapeDtypeStruct((num_m, SUBLANE, Cpad), jnp.float32),
            jax.ShapeDtypeStruct((num_m, SUBLANE, Cpad), jnp.float32),
        ),
        grid=(num_m, num_k),
        in_specs=[
            pl.BlockSpec((tile_m, tile_k), lambda i, k: (i, k)),
            pl.BlockSpec((tile_k, Cpad), lambda i, k: (k, 0)),
        ],
        out_specs=(
            pl.BlockSpec((tile_m, Cpad), lambda i, k: (i, 0)),
            pl.BlockSpec((1, SUBLANE, Cpad), lambda i, k: (i, 0, 0)),
            pl.BlockSpec((1, SUBLANE, Cpad), lambda i, k: (i, 0, 0)),
        ),
        scratch_shapes=[pltpu.VMEM((tile_m, Cpad), jnp.float32)],
        compiler_params=pltpu.CompilerParams(
            dimension_semantics=("parallel", "arbitrary"),
            vmem_limit_bytes=vmem_limit),
    )(patches, w2d)

    # Fold train-mode BN (biased batch stats over the true M rows) into a
    # single scale/shift FMA. Partial sums are merged in f32; the one-pass
    # variance is clamped at zero to guard against cancellation.
    total_sum = psum[:, 0, :].sum(axis=0).reshape(1, Cpad)
    total_ssq = pssq[:, 0, :].sum(axis=0).reshape(1, Cpad)
    mean = total_sum / M
    var = jnp.maximum(total_ssq / M - mean * mean, 0.0)
    scale = gamma_p * jax.lax.rsqrt(var + eps)
    shift = beta_p - mean * scale

    # Phase 2: folded BN affine + LeakyReLU(0.2), lane-dense tiles, parallel M.
    out2d = pl.pallas_call(
        _bn_lrelu_kernel,
        out_shape=jax.ShapeDtypeStruct((Mpad, Cpad), out_dtype),
        grid=(num_m,),
        in_specs=[
            pl.BlockSpec((tile_m, Cpad), lambda i: (i, 0)),
            pl.BlockSpec((1, Cpad), lambda i: (0, 0)),
            pl.BlockSpec((1, Cpad), lambda i: (0, 0)),
        ],
        out_specs=pl.BlockSpec((tile_m, Cpad), lambda i: (i, 0)),
        compiler_params=pltpu.CompilerParams(
            dimension_semantics=("parallel",),
            vmem_limit_bytes=vmem_limit),
    )(conv, scale, shift)

    out = out2d[:M, :Cout].reshape(N, Hout, Wout, Cout)
    if output_format == "NCHW":
        out = jnp.transpose(out, (0, 3, 1, 2))
    return out


def _reference(x, weight, bias, gamma, beta, conv_dtype=jnp.float32, eps=1e-5):
    # Plain-JAX reference: conv(+bias) + train-mode batchnorm + leaky relu.
    y = jax.lax.conv_general_dilated(
        x.astype(conv_dtype), weight.astype(conv_dtype),
        window_strides=(2, 2), padding=((1, 1), (1, 1)),
        dimension_numbers=("NCHW", "OIHW", "NCHW"),
        preferred_element_type=jnp.float32)
    y = y + bias[None, :, None, None]
    mean = jnp.mean(y, axis=(0, 2, 3), keepdims=True)
    var = jnp.mean((y - mean) ** 2, axis=(0, 2, 3), keepdims=True)
    y = (y - mean) * jax.lax.rsqrt(var + eps)
    y = y * gamma[None, :, None, None] + beta[None, :, None, None]
    return jnp.where(y >= 0, y, 0.2 * y)


if __name__ == "__main__":
    nin, nout = 4, 8
    N, H, W = 2, 16, 16

    key = jax.random.PRNGKey(0)
    kx, kw, kb = jax.random.split(key, 3)

    x = jax.random.normal(kx, (N, nin, H, W), dtype=jnp.float32)

    # PyTorch-style uniform init for conv, default ones/zeros for BN affine.
    fan_in = nin * 4 * 4
    bound = 1.0 / jnp.sqrt(fan_in)
    weight = jax.random.uniform(kw, (nout, nin, 4, 4), jnp.float32, -bound, bound)
    bias = jax.random.uniform(kb, (nout,), jnp.float32, -bound, bound)
    gamma = jnp.ones((nout,), jnp.float32)
    beta = jnp.zeros((nout,), jnp.float32)

    out = jax.block_until_ready(dcgan_conv_forward(x, weight, bias, gamma, beta))
    assert out.shape == (N, nout, H // 2, W // 2), out.shape

    # Check against a reference using the same bf16 matmul operands (keeps the
    # bias -> also verifies the bias-cancellation optimization). The residual
    # difference is the bf16 rounding of the conv intermediate (<= 1 ulp).
    ref_bf16 = jax.block_until_ready(
        _reference(x, weight, bias, gamma, beta, conv_dtype=jnp.bfloat16))
    assert jnp.allclose(out, ref_bf16, atol=4e-2, rtol=4e-2), float(
        jnp.max(jnp.abs(out - ref_bf16)))

    # Module-fidelity check against the full-f32 PyTorch-equivalent math
    # (difference = bf16 conv operands + bf16 conv intermediate rounding).
    ref_f32 = jax.block_until_ready(
        _reference(x, weight, bias, gamma, beta, conv_dtype=jnp.float32))
    assert jnp.allclose(out, ref_f32, atol=1e-1, rtol=1e-1), float(
        jnp.max(jnp.abs(out - ref_f32)))

    # NHWC in/out path (for chained layers; skips the layout round trip).
    out_nhwc = jax.block_until_ready(dcgan_conv_forward(
        jnp.transpose(x, (0, 2, 3, 1)), weight, bias, gamma, beta,
        input_format="NHWC"))
    assert jnp.allclose(out_nhwc, jnp.transpose(out, (0, 2, 3, 1)),
                        atol=1e-6, rtol=1e-6)

    print("KERNEL_OK")
</pallas_src>

<mosaic_0001>
module attributes {stable_mosaic.version = 11 : i64} {
  func.func @_conv_stats_kernel(%arg0: i32, %arg1: i32, %arg2: memref<128x128xbf16, #tpu.memory_space<vmem>>, %arg3: memref<128x128xbf16, #tpu.memory_space<vmem>>, %arg4: memref<128x128xbf16, #tpu.memory_space<vmem>>, %arg5: memref<1x8x128xf32, #tpu.memory_space<vmem>>, %arg6: memref<1x8x128xf32, #tpu.memory_space<vmem>>, %arg7: memref<128x128xf32, #tpu.memory_space<vmem>>) attributes {dimension_semantics = [#tpu.dimension_semantics<parallel>, #tpu.dimension_semantics<arbitrary>], iteration_bounds = array<i64: 1, 1>, scalar_prefetch = 0 : i64, scratch_operands = 1 : i64, tpu.core_type = #tpu.core_type<tc>, window_params = [{transform_indices = @transform_0, window_bounds = array<i64: 128, 128>}, {transform_indices = @transform_1, window_bounds = array<i64: 128, 128>}, {transform_indices = @transform_2, window_bounds = array<i64: 128, 128>}, {transform_indices = @transform_3, window_bounds = array<i64: 1, 8, 128>}, {transform_indices = @transform_4, window_bounds = array<i64: 1, 8, 128>}]} {
    %c0_i32 = arith.constant 0 : i32
    %0 = arith.cmpi eq, %arg1, %c0_i32 : i32
    %1 = arith.extui %0 : i1 to i32
    %c0_i32_0 = arith.constant 0 : i32
    %2 = arith.cmpi ne, %1, %c0_i32_0 : i32
    scf.if %2 {
      %cst_10 = arith.constant 0.000000e+00 : f32
      %12 = vector.broadcast %cst_10 : f32 to vector<128x128xf32>
      %c0_11 = arith.constant 0 : index
      %c0_12 = arith.constant 0 : index
      %13 = vector.load %arg7[%c0_11, %c0_12] : memref<128x128xf32, #tpu.memory_space<vmem>>, vector<128x128xf32>
      tpu.vector_store %arg7[%c0_11, %c0_12], %12 {strides = array<i32>} : memref<128x128xf32, #tpu.memory_space<vmem>>, vector<128x128xf32>,
    } else {
    }
    %c0 = arith.constant 0 : index
    %c0_1 = arith.constant 0 : index
    %3 = vector.load %arg7[%c0, %c0_1] : memref<128x128xf32, #tpu.memory_space<vmem>>, vector<128x128xf32>
    %c0_2 = arith.constant 0 : index
    %c0_3 = arith.constant 0 : index
    %4 = vector.load %arg2[%c0_2, %c0_3] : memref<128x128xbf16, #tpu.memory_space<vmem>>, vector<128x128xbf16>
    %c0_4 = arith.constant 0 : index
    %c0_5 = arith.constant 0 : index
    %5 = vector.load %arg3[%c0_4, %c0_5] : memref<128x128xbf16, #tpu.memory_space<vmem>>, vector<128x128xbf16>
    %cst = arith.constant dense<0.000000e+00> : vector<128x128xf32>
    %6 = tpu.matmul %4, %5, %cst {dimension_numbers = #tpu.dot_dimension_numbers<[1], [0], [0], [1], [0, 0, 1, 1], [], []>} : vector<128x128xbf16>, vector<128x128xbf16>, vector<128x128xf32> -> vector<128x128xf32>
    %7 = arith.addf %3, %6 : vector<128x128xf32>
    %c0_6 = arith.constant 0 : index
    %c0_7 = arith.constant 0 : index
    %8 = vector.load %arg7[%c0_6, %c0_7] : memref<128x128xf32, #tpu.memory_space<vmem>>, vector<128x128xf32>
    tpu.vector_store %arg7[%c0_6, %c0_7], %7 {strides = array<i32>} : memref<128x128xf32, #tpu.memory_space<vmem>>, vector<128x128xf32>,
    %c0_i32_8 = arith.constant 0 : i32
    %9 = arith.cmpi eq, %arg1, %c0_i32_8 : i32
    %10 = arith.extui %9 : i1 to i32
    %c0_i32_9 = arith.constant 0 : i32
    %11 = arith.cmpi ne, %10, %c0_i32_9 : i32
    scf.if %11 {
      %c0_10 = arith.constant 0 : index
      %c0_11 = arith.constant 0 : index
      %12 = vector.load %arg7[%c0_10, %c0_11] : memref<128x128xf32, #tpu.memory_space<vmem>>, vector<128x128xf32>
      %13 = arith.truncf %12 : vector<128x128xf32> to vector<128x128xbf16>
      %c0_12 = arith.constant 0 : index
      %c0_13 = arith.constant 0 : index
      %14 = vector.load %arg4[%c0_12, %c0_13] : memref<128x128xbf16, #tpu.memory_space<vmem>>, vector<128x128xbf16>
      tpu.vector_store %arg4[%c0_12, %c0_13], %13 {strides = array<i32>} : memref<128x128xbf16, #tpu.memory_space<vmem>>, vector<128x128xbf16>,
      %cst_14 = arith.constant dense<0.000000e+00> : vector<128xf32>
      %15 = vector.multi_reduction <add>, %12, %cst_14 [0] : vector<128x128xf32> to vector<128xf32>
      %16 = vector.shape_cast %15 : vector<128xf32> to vector<1x128xf32>
      %17 = arith.mulf %12, %12 : vector<128x128xf32>
      %cst_15 = arith.constant dense<0.000000e+00> : vector<128xf32>
      %18 = vector.multi_reduction <add>, %17, %cst_15 [0] : vector<128x128xf32> to vector<128xf32>
      %19 = vector.shape_cast %18 : vector<128xf32> to vector<1x128xf32>
      %20 = vector.shape_cast %16 : vector<1x128xf32> to vector<1x128xf32>
      %21 = vector.broadcast %20 : vector<1x128xf32> to vector<8x128xf32>
      %c0_16 = arith.constant 0 : index
      %c0_17 = arith.constant 0 : index
      %c0_18 = arith.constant 0 : index
      %22 = vector.load %arg5[%c0_16, %c0_17, %c0_18] : memref<1x8x128xf32, #tpu.memory_space<vmem>>, vector<1x8x128xf32>
      %23 = vector.shape_cast %22 : vector<1x8x128xf32> to vector<8x128xf32>
      %24 = vector.shape_cast %21 : vector<8x128xf32> to vector<1x8x128xf32>
      tpu.vector_store %arg5[%c0_16, %c0_17, %c0_18], %24 {strides = array<i32>} : memref<1x8x128xf32, #tpu.memory_space<vmem>>, vector<1x8x128xf32>,
      %25 = vector.shape_cast %19 : vector<1x128xf32> to vector<1x128xf32>
      %26 = vector.broadcast %25 : vector<1x128xf32> to vector<8x128xf32>
      %c0_19 = arith.constant 0 : index
      %c0_20 = arith.constant 0 : index
      %c0_21 = arith.constant 0 : index
      %27 = vector.load %arg6[%c0_19, %c0_20, %c0_21] : memref<1x8x128xf32, #tpu.memory_space<vmem>>, vector<1x8x128xf32>
      %28 = vector.shape_cast %27 : vector<1x8x128xf32> to vector<8x128xf32>
      %29 = vector.shape_cast %26 : vector<8x128xf32> to vector<1x8x128xf32>
      tpu.vector_store %arg6[%c0_19, %c0_20, %c0_21], %29 {strides = array<i32>} : memref<1x8x128xf32, #tpu.memory_space<vmem>>, vector<1x8x128xf32>,
    } else {
    }
    return
  }
  func.func @transform_0(%arg0: i32, %arg1: i32) -> (i32, i32) {
    %c0_i32 = arith.constant 0 : i32
    return %arg0, %arg1 : i32, i32
  }
  func.func @transform_1(%arg0: i32, %arg1: i32) -> (i32, i32) {
    %c0_i32 = arith.constant 0 : i32
    %c0_i32_0 = arith.constant 0 : i32
    return %arg1, %c0_i32 : i32, i32
  }
  func.func @transform_2(%arg0: i32, %arg1: i32) -> (i32, i32) {
    %c0_i32 = arith.constant 0 : i32
    %c0_i32_0 = arith.constant 0 : i32
    return %arg0, %c0_i32 : i32, i32
  }
  func.func @transform_3(%arg0: i32, %arg1: i32) -> (i32, i32, i32) {
    %c0_i32 = arith.constant 0 : i32
    %c0_i32_0 = arith.constant 0 : i32
    %c0_i32_1 = arith.constant 0 : i32
    return %arg0, %c0_i32, %c0_i32_0 : i32, i32, i32
  }
  func.func @transform_4(%arg0: i32, %arg1: i32) -> (i32, i32, i32) {
    %c0_i32 = arith.constant 0 : i32
    %c0_i32_0 = arith.constant 0 : i32
    %c0_i32_1 = arith.constant 0 : i32
    return %arg0, %c0_i32, %c0_i32_0 : i32, i32, i32
  }
}

</mosaic_0001>

<llo_original>
// kernel: tpu_custom_call.1
$region0: #{tpu_custom_call.1}
  #allocation0 [shape = 'u32[]', space=smem, size = 0x4, offset = 0x4, fixed_abs, tag = 'smem constant byte address 0x4 - core index']
  #allocation1 [shape = 'u32[144,128]{1,0:T(1,128)}', space=vmem, size = 0x12000, scoped, tag = 'internal scratch']
  #allocation2 [shape = 'f32[128,128]{1,0:T(8,128)}', space=vmem, size = 0x10000, scoped, tag = 'scratch operand']
  %s0 = inlined_call_operand.hbm [shape: bf16[128,128], index: 0, kind: input, shape index: {}]
  %s1 = inlined_call_operand.hbm [shape: bf16[128,128], index: 1, kind: input, shape index: {}]
  %s2 = inlined_call_operand.hbm [shape: bf16[128,128], index: 2, kind: output, shape index: {0}]
  %s3 = inlined_call_operand.hbm [shape: f32[1,8,128], index: 3, kind: output, shape index: {1}]
  %s4 = inlined_call_operand.hbm [shape: f32[1,8,128], index: 4, kind: output, shape index: {2}]
  %5 = xla_tuple %s2, %s3, %s4
  %s6 = sld [smem:[#allocation0]]
  $region50: #{tpu_custom_call.1} parent=0
    _
  %s8 = ssub.s32 1, %s6
  %s9 = scalar_select 0, %s8, %s6
  $region1: #{tpu_custom_call.1} parent=0
    #allocation3 [shape = 'u8[32768]{0}', space=vmem, size = 0x8000, scoped, tag = 'input window, operand 0, single buffered']
    #allocation4 [shape = 's32[1]{0}', space=sflag, size = 0x4, scoped, tag = 'scoped memory for tpu_custom_call.1']
    #allocation5 [shape = 's32[1]{0}', space=sflag, size = 0x4, scoped, tag = 'scoped memory for tpu_custom_call.1']
    #allocation6 [shape = 'u8[32768]{0}', space=vmem, size = 0x8000, scoped, tag = 'input window, operand 1, single buffered']
    #allocation7 [shape = 's32[1]{0}', space=sflag, size = 0x4, scoped, tag = 'scoped memory for tpu_custom_call.1']
    #allocation8 [shape = 'u8[32768]{0}', space=vmem, size = 0x8000, scoped, tag = 'output window, operand 0, single buffered']
    #allocation9 [shape = 'u8[4096]{0}', space=vmem, size = 0x1000, scoped, tag = 'output window, operand 1, single buffered']
    #allocation10 [shape = 's32[1]{0}', space=sflag, size = 0x4, scoped, tag = 'scoped memory for tpu_custom_call.1']
    #allocation11 [shape = 'u8[4096]{0}', space=vmem, size = 0x1000, scoped, tag = 'output window, operand 2, single buffered']
    %10 = vsyncpa [#allocation4], 0
    %11 = vsyncpa [#allocation7], 0
    %12 = vsyncpa [#allocation5], 0
    %13 = vsyncpa [#allocation10], 0
    // Predicated region
    $region2: #{tpu_custom_call.1} parent=1 // pred_check
      _
    $region3: #{tpu_custom_call.1} parent=1 // pred_check_branch
      %15 = sbr.rel (0) target = $region5
    $region4: #{tpu_custom_call.1} parent=1 // pred_region
      %s17 = ssub.s32 1024, 1024
      %18 = vsyncadd [#allocation4], %s17
      %s19 = sshll.u32 [#allocation3], 4
      %s20 = int_to_ptr.vmem [resolvable:$true] %s19
      %25 = dma.hbm_to_vmem [thread:$0]  %s0, 1024, %s20, [#allocation4], 64, 64, 4
    $region5: #{tpu_custom_call.1} parent=1 // pred_fallthru
      _
    // Predicated region
    $region6: #{tpu_custom_call.1} parent=1 // pred_check
      _
    $region7: #{tpu_custom_call.1} parent=1 // pred_check_branch
      %27 = sbr.rel (0) target = $region9
    $region8: #{tpu_custom_call.1} parent=1 // pred_region
      %s29 = ssub.s32 1024, 1024
      %30 = vsyncadd [#allocation7], %s29
      %s31 = sshll.u32 [#allocation6], 4
      %s32 = int_to_ptr.vmem [resolvable:$true] %s31
      %37 = dma.hbm_to_vmem [thread:$0]  %s1, 1024, %s32, [#allocation7], 64, 64, 4
    $region9: #{tpu_custom_call.1} parent=1 // pred_fallthru
      _
    // Predicated region
    $region10: #{tpu_custom_call.1} parent=1 // pred_check
      _
    $region11: #{tpu_custom_call.1} parent=1 // pred_check_branch
      %39 = sbr.rel (0) target = $region13
    $region12: #{tpu_custom_call.1} parent=1 // pred_region
      %40 = dma.done [#allocation4], 1024
    $region13: #{tpu_custom_call.1} parent=1 // pred_fallthru
      _
    // Predicated region
    $region14: #{tpu_custom_call.1} parent=1 // pred_check
      _
    $region15: #{tpu_custom_call.1} parent=1 // pred_check_branch
      %42 = sbr.rel (0) target = $region17
    $region16: #{tpu_custom_call.1} parent=1 // pred_region
      %43 = dma.done [#allocation7], 1024
    $region17: #{tpu_custom_call.1} parent=1 // pred_fallthru
      _
    %p45 = scmp.eq.s32.totalorder 0, 0
    // Predicated region
    $region18: #{tpu_custom_call.1} parent=1 // pred_check
      %p46 = pneg %p45
    $region19: #{tpu_custom_call.1} parent=1 // pred_check_branch
      %48 = sbr.rel (%p46) target = $region21
    $region20: #{tpu_custom_call.1} parent=1 // pred_region
      %49 = vst [vmem:[#allocation2] sm:$0xff] 0.0
      %50 = vst [vmem:[#allocation2 + $0x8] sm:$0xff] 0.0
      %51 = vst [vmem:[#allocation2 + $0x10] sm:$0xff] 0.0
      %52 = vst [vmem:[#allocation2 + $0x18] sm:$0xff] 0.0
      %53 = vst [vmem:[#allocation2 + $0x20] sm:$0xff] 0.0
      %54 = vst [vmem:[#allocation2 + $0x28] sm:$0xff] 0.0
      %55 = vst [vmem:[#allocation2 + $0x30] sm:$0xff] 0.0
      %56 = vst [vmem:[#allocation2 + $0x38] sm:$0xff] 0.0
      %57 = vst [vmem:[#allocation2 + $0x40] sm:$0xff] 0.0
      %58 = vst [vmem:[#allocation2 + $0x48] sm:$0xff] 0.0
      %59 = vst [vmem:[#allocation2 + $0x50] sm:$0xff] 0.0
      %60 = vst [vmem:[#allocation2 + $0x58] sm:$0xff] 0.0
      %61 = vst [vmem:[#allocation2 + $0x60] sm:$0xff] 0.0
      %62 = vst [vmem:[#allocation2 + $0x68] sm:$0xff] 0.0
      %63 = vst [vmem:[#allocation2 + $0x70] sm:$0xff] 0.0
      %64 = vst [vmem:[#allocation2 + $0x78] sm:$0xff] 0.0
    $region21: #{tpu_custom_call.1} parent=1 // pred_fallthru
      _
    %v65 = vld [vmem:[#allocation2] sm:$0xff]
    %v66 = vld [vmem:[#allocation2 + $0x8] sm:$0xff]
    %v67 = vld [vmem:[#allocation2 + $0x10] sm:$0xff]
    %v68 = vld [vmem:[#allocation2 + $0x18] sm:$0xff]
    %v69 = vld [vmem:[#allocation2 + $0x20] sm:$0xff]
    %v70 = vld [vmem:[#allocation2 + $0x28] sm:$0xff]
    %v71 = vld [vmem:[#allocation2 + $0x30] sm:$0xff]
    %v72 = vld [vmem:[#allocation2 + $0x38] sm:$0xff]
    %v73 = vld [vmem:[#allocation2 + $0x40] sm:$0xff]
    %v74 = vld [vmem:[#allocation2 + $0x48] sm:$0xff]
    %v75 = vld [vmem:[#allocation2 + $0x50] sm:$0xff]
    %v76 = vld [vmem:[#allocation2 + $0x58] sm:$0xff]
    %v77 = vld [vmem:[#allocation2 + $0x60] sm:$0xff]
    %v78 = vld [vmem:[#allocation2 + $0x68] sm:$0xff]
    %v79 = vld [vmem:[#allocation2 + $0x70] sm:$0xff]
    %v80 = vld [vmem:[#allocation2 + $0x78] sm:$0xff]
    %v81 = vld [vmem:[#allocation3] sm:$0xf]
    %v82 = vld [vmem:[#allocation3 + $0x4] sm:$0xf]
    %v83 = vld [vmem:[#allocation3 + $0x8] sm:$0xf]
    %v84 = vld [vmem:[#allocation3 + $0xc] sm:$0xf]
    %v85 = vld [vmem:[#allocation3 + $0x10] sm:$0xf]
    %v86 = vld [vmem:[#allocation3 + $0x14] sm:$0xf]
    %v87 = vld [vmem:[#allocation3 + $0x18] sm:$0xf]
    %v88 = vld [vmem:[#allocation3 + $0x1c] sm:$0xf]
    %v89 = vld [vmem:[#allocation3 + $0x20] sm:$0xf]
    %v90 = vld [vmem:[#allocation3 + $0x24] sm:$0xf]
    %v91 = vld [vmem:[#allocation3 + $0x28] sm:$0xf]
    %v92 = vld [vmem:[#allocation3 + $0x2c] sm:$0xf]
    %v93 = vld [vmem:[#allocation3 + $0x30] sm:$0xf]
    %v94 = vld [vmem:[#allocation3 + $0x34] sm:$0xf]
    %v95 = vld [vmem:[#allocation3 + $0x38] sm:$0xf]
    %v96 = vld [vmem:[#allocation3 + $0x3c] sm:$0xf]
    %v97 = vld [vmem:[#allocation6] sm:$0xf]
    %v98 = vld [vmem:[#allocation6 + $0x4] sm:$0xf]
    %v99 = vld [vmem:[#allocation6 + $0x8] sm:$0xf]
    %v100 = vld [vmem:[#allocation6 + $0xc] sm:$0xf]
    %v101 = vld [vmem:[#allocation6 + $0x10] sm:$0xf]
    %v102 = vld [vmem:[#allocation6 + $0x14] sm:$0xf]
    %v103 = vld [vmem:[#allocation6 + $0x18] sm:$0xf]
    %v104 = vld [vmem:[#allocation6 + $0x1c] sm:$0xf]
    %v105 = vld [vmem:[#allocation6 + $0x20] sm:$0xf]
    %v106 = vld [vmem:[#allocation6 + $0x24] sm:$0xf]
    %v107 = vld [vmem:[#allocation6 + $0x28] sm:$0xf]
    %v108 = vld [vmem:[#allocation6 + $0x2c] sm:$0xf]
    %v109 = vld [vmem:[#allocation6 + $0x30] sm:$0xf]
    %v110 = vld [vmem:[#allocation6 + $0x34] sm:$0xf]
    %v111 = vld [vmem:[#allocation6 + $0x38] sm:$0xf]
    %v112 = vld [vmem:[#allocation6 + $0x3c] sm:$0xf]
    %v129 = vunpack.c.l.b16 %v81
    %v130 = vunpack.c.l.b16 %v82
    %v131 = vunpack.c.l.b16 %v83
    %v132 = vunpack.c.l.b16 %v84
    %v133 = vunpack.c.l.b16 %v85
    %v134 = vunpack.c.l.b16 %v86
    %v135 = vunpack.c.l.b16 %v87
    %v136 = vunpack.c.l.b16 %v88
    %v137 = vunpack.c.l.b16 %v89
    %v138 = vunpack.c.l.b16 %v90
    %v139 = vunpack.c.l.b16 %v91
    %v140 = vunpack.c.l.b16 %v92
    %v141 = vunpack.c.l.b16 %v93
    %v142 = vunpack.c.l.b16 %v94
    %v143 = vunpack.c.l.b16 %v95
    %v144 = vunpack.c.l.b16 %v96
    %v145 = vpack.c.b16 %v130, %v129
    %v146 = vpack.c.b16 %v132, %v131
    %v147 = vpack.c.b16 %v134, %v133
    %v148 = vpack.c.b16 %v136, %v135
    %v149 = vpack.c.b16 %v138, %v137
    %v150 = vpack.c.b16 %v140, %v139
    %v151 = vpack.c.b16 %v142, %v141
    %v152 = vpack.c.b16 %v144, %v143
    %v177 = vunpack.c.l.b16 %v97
    %v178 = vunpack.c.l.b16 %v98
    %v179 = vunpack.c.l.b16 %v99
    %v180 = vunpack.c.l.b16 %v100
    %v181 = vunpack.c.l.b16 %v101
    %v182 = vunpack.c.l.b16 %v102
    %v183 = vunpack.c.l.b16 %v103
    %v184 = vunpack.c.l.b16 %v104
    %v185 = vunpack.c.l.b16 %v105
    %v186 = vunpack.c.l.b16 %v106
    %v187 = vunpack.c.l.b16 %v107
    %v188 = vunpack.c.l.b16 %v108
    %v189 = vunpack.c.l.b16 %v109
    %v190 = vunpack.c.l.b16 %v110
    %v191 = vunpack.c.l.b16 %v111
    %v192 = vunpack.c.l.b16 %v112
    %v193 = vpack.c.b16 %v178, %v177
    %v194 = vpack.c.b16 %v180, %v179
    %v195 = vpack.c.b16 %v182, %v181
    %v196 = vpack.c.b16 %v184, %v183
    %v197 = vpack.c.b16 %v186, %v185
    %v198 = vpack.c.b16 %v188, %v187
    %v199 = vpack.c.b16 %v190, %v189
    %v200 = vpack.c.b16 %v192, %v191
    %209 = vmatprep.subr.bf16.mxu0 0
    %210 = vmatpush1.bf16.msra.mxu0 %v200
    %211 = vmatprep.subr.bf16.mxu0 0
    %212 = vmatpush1.bf16.msra.mxu0 %v199
    %213 = vmatprep.subr.bf16.mxu0 0
    %214 = vmatpush1.bf16.msra.mxu0 %v198
    %215 = vmatprep.subr.bf16.mxu0 0
    %216 = vmatpush1.bf16.msra.mxu0 %v197
    %217 = vmatprep.subr.bf16.mxu0 0
    %218 = vmatpush1.bf16.msra.mxu0 %v196
    %219 = vmatprep.subr.bf16.mxu0 0
    %220 = vmatpush1.bf16.msra.mxu0 %v195
    %221 = vmatprep.subr.bf16.mxu0 0
    %222 = vmatpush1.bf16.msra.mxu0 %v194
    %223 = vmatprep.subr.bf16.mxu0 0
    %224 = vmatpush1.bf16.msra.mxu0 %v193
    %225 = vmatprep.subr.bf16.mxu0 0
    %226 = vmatpush2.bf16.msra.mxu0 0
    %227 = vmatprep.subr.bf16.mxu0 0
    %228 = vmatpush2.bf16.msra.mxu0 0
    %229 = vmatprep.subr.bf16.mxu0 0
    %230 = vmatpush2.bf16.msra.mxu0 0
    %231 = vmatprep.subr.bf16.mxu0 0
    %232 = vmatpush2.bf16.msra.mxu0 0
    %233 = vmatprep.subr.bf16.mxu0 0
    %234 = vmatpush2.bf16.msra.mxu0 0
    %235 = vmatprep.subr.bf16.mxu0 0
    %236 = vmatpush2.bf16.msra.mxu0 0
    %237 = vmatprep.subr.bf16.mxu0 0
    %238 = vmatpush2.bf16.msra.mxu0 0
    %239 = vmatprep.subr.bf16.mxu0 0
    %240 = vmatpush2.bf16.msra.mxu0 0
    %241 = vmatprep.mubr.bf16.mxu0 0
    %242 = vmatmul.mubr.bf16.gmra.mxu0 %v145
    %v243 = vpop.f32.mrf.mxu0
    %v244 = vadd.f32 0.0, %v243
    %v245 = vpop.f32.mrf.mxu0
    %v246 = vpop.f32.mrf.mxu0
    %v247 = vadd.f32 0.0, %v246
    %v248 = vpop.f32.mrf.mxu0
    %249 = vmatprep.mubr.bf16.mxu0 0
    %250 = vmatmul.mubr.bf16.gmra.mxu0 %v146
    %v251 = vpop.f32.mrf.mxu0
    %v252 = vadd.f32 0.0, %v251
    %v253 = vpop.f32.mrf.mxu0
    %v254 = vpop.f32.mrf.mxu0
    %v255 = vadd.f32 0.0, %v254
    %v256 = vpop.f32.mrf.mxu0
    %257 = vmatprep.mubr.bf16.mxu0 0
    %258 = vmatmul.mubr.bf16.gmra.mxu0 %v147
    %v259 = vpop.f32.mrf.mxu0
    %v260 = vadd.f32 0.0, %v259
    %v261 = vpop.f32.mrf.mxu0
    %v262 = vpop.f32.mrf.mxu0
    %v263 = vadd.f32 0.0, %v262
    %v264 = vpop.f32.mrf.mxu0
    %265 = vmatprep.mubr.bf16.mxu0 0
    %266 = vmatmul.mubr.bf16.gmra.mxu0 %v148
    %v267 = vpop.f32.mrf.mxu0
    %v268 = vadd.f32 0.0, %v267
    %v269 = vpop.f32.mrf.mxu0
    %v270 = vpop.f32.mrf.mxu0
    %v271 = vadd.f32 0.0, %v270
    %v272 = vpop.f32.mrf.mxu0
    %273 = vmatprep.mubr.bf16.mxu0 0
    %274 = vmatmul.mubr.bf16.gmra.mxu0 %v149
    %v275 = vpop.f32.mrf.mxu0
    %v276 = vadd.f32 0.0, %v275
    %v277 = vpop.f32.mrf.mxu0
    %v278 = vpop.f32.mrf.mxu0
    %v279 = vadd.f32 0.0, %v278
    %v280 = vpop.f32.mrf.mxu0
    %281 = vmatprep.mubr.bf16.mxu0 0
    %282 = vmatmul.mubr.bf16.gmra.mxu0 %v150
    %v283 = vpop.f32.mrf.mxu0
    %v284 = vadd.f32 0.0, %v283
    %v285 = vpop.f32.mrf.mxu0
    %v286 = vpop.f32.mrf.mxu0
    %v287 = vadd.f32 0.0, %v286
    %v288 = vpop.f32.mrf.mxu0
    %289 = vmatprep.mubr.bf16.mxu0 0
    %290 = vmatmul.mubr.bf16.gmra.mxu0 %v151
    %v291 = vpop.f32.mrf.mxu0
    %v292 = vadd.f32 0.0, %v291
    %v293 = vpop.f32.mrf.mxu0
    %v294 = vpop.f32.mrf.mxu0
    %v295 = vadd.f32 0.0, %v294
    %v296 = vpop.f32.mrf.mxu0
    %297 = vmatprep.mubr.bf16.mxu0 0
    %298 = vmatmul.mubr.bf16.gmra.mxu0 %v152
    %v299 = vpop.f32.mrf.mxu0
    %v300 = vadd.f32 0.0, %v299
    %v301 = vpop.f32.mrf.mxu0
    %v302 = vpop.f32.mrf.mxu0
    %v303 = vadd.f32 0.0, %v302
    %v304 = vpop.f32.mrf.mxu0
    %305 = vdwg.mxu0
    %v306 = vadd.f32 %v65, %v244
    %v307 = vadd.f32 %v66, %v247
    %v308 = vadd.f32 %v67, %v252
    %v309 = vadd.f32 %v68, %v255
    %v310 = vadd.f32 %v69, %v260
    %v311 = vadd.f32 %v70, %v263
    %v312 = vadd.f32 %v71, %v268
    %v313 = vadd.f32 %v72, %v271
    %v314 = vadd.f32 %v73, %v276
    %v315 = vadd.f32 %v74, %v279
    %v316 = vadd.f32 %v75, %v284
    %v317 = vadd.f32 %v76, %v287
    %v318 = vadd.f32 %v77, %v292
    %v319 = vadd.f32 %v78, %v295
    %v320 = vadd.f32 %v79, %v300
    %v321 = vadd.f32 %v80, %v303
    %322 = vst [vmem:[#allocation2] sm:$0xff] %v306
    %323 = vst [vmem:[#allocation2 + $0x8] sm:$0xff] %v307
    %324 = vst [vmem:[#allocation2 + $0x10] sm:$0xff] %v308
    %325 = vst [vmem:[#allocation2 + $0x18] sm:$0xff] %v309
    %326 = vst [vmem:[#allocation2 + $0x20] sm:$0xff] %v310
    %327 = vst [vmem:[#allocation2 + $0x28] sm:$0xff] %v311
    %328 = vst [vmem:[#allocation2 + $0x30] sm:$0xff] %v312
    %329 = vst [vmem:[#allocation2 + $0x38] sm:$0xff] %v313
    %330 = vst [vmem:[#allocation2 + $0x40] sm:$0xff] %v314
    %331 = vst [vmem:[#allocation2 + $0x48] sm:$0xff] %v315
    %332 = vst [vmem:[#allocation2 + $0x50] sm:$0xff] %v316
    %333 = vst [vmem:[#allocation2 + $0x58] sm:$0xff] %v317
    %334 = vst [vmem:[#allocation2 + $0x60] sm:$0xff] %v318
    %335 = vst [vmem:[#allocation2 + $0x68] sm:$0xff] %v319
    %336 = vst [vmem:[#allocation2 + $0x70] sm:$0xff] %v320
    %337 = vst [vmem:[#allocation2 + $0x78] sm:$0xff] %v321
    // Predicated region
    $region22: #{tpu_custom_call.1} parent=1 // pred_check
      %p338 = pneg %p45
    $region23: #{tpu_custom_call.1} parent=1 // pred_check_branch
      %340 = sbr.rel (%p338) target = $region25
    $region24: #{tpu_custom_call.1} parent=1 // pred_region
      %v341 = vld [vmem:[#allocation2] sm:$0xff]
      %v342 = vld [vmem:[#allocation2 + $0x8] sm:$0xff]
      %v343 = vld [vmem:[#allocation2 + $0x10] sm:$0xff]
      %v344 = vld [vmem:[#allocation2 + $0x18] sm:$0xff]
      %v345 = vld [vmem:[#allocation2 + $0x20] sm:$0xff]
      %v346 = vld [vmem:[#allocation2 + $0x28] sm:$0xff]
      %v347 = vld [vmem:[#allocation2 + $0x30] sm:$0xff]
      %v348 = vld [vmem:[#allocation2 + $0x38] sm:$0xff]
      %v349 = vld [vmem:[#allocation2 + $0x40] sm:$0xff]
      %v350 = vld [vmem:[#allocation2 + $0x48] sm:$0xff]
      %v351 = vld [vmem:[#allocation2 + $0x50] sm:$0xff]
      %v352 = vld [vmem:[#allocation2 + $0x58] sm:$0xff]
      %v353 = vld [vmem:[#allocation2 + $0x60] sm:$0xff]
      %v354 = vld [vmem:[#allocation2 + $0x68] sm:$0xff]
      %v355 = vld [vmem:[#allocation2 + $0x70] sm:$0xff]
      %v356 = vld [vmem:[#allocation2 + $0x78] sm:$0xff]
      %v357 = vpack.c.bf16 %v342, %v341
      %v358 = vpack.c.bf16 %v344, %v343
      %v359 = vpack.c.bf16 %v346, %v345
      %v360 = vpack.c.bf16 %v348, %v347
      %v361 = vpack.c.bf16 %v350, %v349
      %v362 = vpack.c.bf16 %v352, %v351
      %v363 = vpack.c.bf16 %v354, %v353
      %v364 = vpack.c.bf16 %v356, %v355
      %v373 = vunpack.c.l.b16 %v357
      %v374 = vunpack.c.h.b16 %v357
      %v375 = vunpack.c.l.b16 %v358
      %v376 = vunpack.c.h.b16 %v358
      %v377 = vunpack.c.l.b16 %v359
      %v378 = vunpack.c.h.b16 %v359
      %v379 = vunpack.c.l.b16 %v360
      %v380 = vunpack.c.h.b16 %v360
      %v381 = vunpack.c.l.b16 %v361
      %v382 = vunpack.c.h.b16 %v361
      %v383 = vunpack.c.l.b16 %v362
      %v384 = vunpack.c.h.b16 %v362
      %v385 = vunpack.c.l.b16 %v363
      %v386 = vunpack.c.h.b16 %v363
      %v387 = vunpack.c.l.b16 %v364
      %v388 = vunpack.c.h.b16 %v364
      %v389 = vpack.c.b16 %v373, %v373
      %v390 = vpack.c.b16 %v374, %v374
      %v391 = vpack.c.b16 %v375, %v375
      %v392 = vpack.c.b16 %v376, %v376
      %v393 = vpack.c.b16 %v377, %v377
      %v394 = vpack.c.b16 %v378, %v378
      %v395 = vpack.c.b16 %v379, %v379
      %v396 = vpack.c.b16 %v380, %v380
      %v397 = vpack.c.b16 %v381, %v381
      %v398 = vpack.c.b16 %v382, %v382
      %v399 = vpack.c.b16 %v383, %v383
      %v400 = vpack.c.b16 %v384, %v384
      %v401 = vpack.c.b16 %v385, %v385
      %v402 = vpack.c.b16 %v386, %v386
      %v403 = vpack.c.b16 %v387, %v387
      %v404 = vpack.c.b16 %v388, %v388
      %421 = vst [vmem:[#allocation8] sm:$0xf] %v389
      %422 = vst [vmem:[#allocation8 + $0x4] sm:$0xf] %v390
      %423 = vst [vmem:[#allocation8 + $0x8] sm:$0xf] %v391
      %424 = vst [vmem:[#allocation8 + $0xc] sm:$0xf] %v392
      %425 = vst [vmem:[#allocation8 + $0x10] sm:$0xf] %v393
      %426 = vst [vmem:[#allocation8 + $0x14] sm:$0xf] %v394
      %427 = vst [vmem:[#allocation8 + $0x18] sm:$0xf] %v395
      %428 = vst [vmem:[#allocation8 + $0x1c] sm:$0xf] %v396
      %429 = vst [vmem:[#allocation8 + $0x20] sm:$0xf] %v397
      %430 = vst [vmem:[#allocation8 + $0x24] sm:$0xf] %v398
      %431 = vst [vmem:[#allocation8 + $0x28] sm:$0xf] %v399
      %432 = vst [vmem:[#allocation8 + $0x2c] sm:$0xf] %v400
      %433 = vst [vmem:[#allocation8 + $0x30] sm:$0xf] %v401
      %434 = vst [vmem:[#allocation8 + $0x34] sm:$0xf] %v402
      %435 = vst [vmem:[#allocation8 + $0x38] sm:$0xf] %v403
      %436 = vst [vmem:[#allocation8 + $0x3c] sm:$0xf] %v404
      %v437 = vadd.f32 %v341, %v342
      %v438 = vadd.f32 %v437, %v343
      %v439 = vadd.f32 %v438, %v344
      %v440 = vadd.f32 %v439, %v345
      %v441 = vadd.f32 %v440, %v346
      %v442 = vadd.f32 %v441, %v347
      %v443 = vadd.f32 %v442, %v348
      %v444 = vadd.f32 %v443, %v349
      %v445 = vadd.f32 %v444, %v350
      %v446 = vadd.f32 %v445, %v351
      %v447 = vadd.f32 %v446, %v352
      %v448 = vadd.f32 %v447, %v353
      %v449 = vadd.f32 %v448, %v354
      %v450 = vadd.f32 %v449, %v355
      %v451 = vadd.f32 %v450, %v356
      %v452 = vrot.slane %v451, 4
      %v453 = vadd.f32 %v451, %v452
      %v454 = vrot.slane %v453, 2
      %v455 = vadd.f32 %v453, %v454
      %v456 = vrot.slane %v455, 1
      %v457 = vadd.f32 %v455, %v456
      %v458 = vmul.f32 %v341, %v341
      %v459 = vmul.f32 %v342, %v342
      %v460 = vmul.f32 %v343, %v343
      %v461 = vmul.f32 %v344, %v344
      %v462 = vmul.f32 %v345, %v345
      %v463 = vmul.f32 %v346, %v346
      %v464 = vmul.f32 %v347, %v347
      %v465 = vmul.f32 %v348, %v348
      %v466 = vmul.f32 %v349, %v349
      %v467 = vmul.f32 %v350, %v350
      %v468 = vmul.f32 %v351, %v351
      %v469 = vmul.f32 %v352, %v352
      %v470 = vmul.f32 %v353, %v353
      %v471 = vmul.f32 %v354, %v354
      %v472 = vmul.f32 %v355, %v355
      %v473 = vmul.f32 %v356, %v356
      %v474 = vadd.f32 %v458, %v459
      %v475 = vadd.f32 %v474, %v460
      %v476 = vadd.f32 %v475, %v461
      %v477 = vadd.f32 %v476, %v462
      %v478 = vadd.f32 %v477, %v463
      %v479 = vadd.f32 %v478, %v464
      %v480 = vadd.f32 %v479, %v465
      %v481 = vadd.f32 %v480, %v466
      %v482 = vadd.f32 %v481, %v467
      %v483 = vadd.f32 %v482, %v468
      %v484 = vadd.f32 %v483, %v469
      %v485 = vadd.f32 %v484, %v470
      %v486 = vadd.f32 %v485, %v471
      %v487 = vadd.f32 %v486, %v472
      %v488 = vadd.f32 %v487, %v473
      %v489 = vrot.slane %v488, 4
      %v490 = vadd.f32 %v488, %v489
      %v491 = vrot.slane %v490, 2
      %v492 = vadd.f32 %v490, %v491
      %v493 = vrot.slane %v492, 1
      %v494 = vadd.f32 %v492, %v493
      %495 = vst [vmem:[#allocation9] sm:$0xff] %v457
      %496 = vst [vmem:[#allocation11] sm:$0xff] %v494
    $region25: #{tpu_custom_call.1} parent=1 // pred_fallthru
      _
    // Predicated region
    $region26: #{tpu_custom_call.1} parent=1 // pred_check
      _
    $region27: #{tpu_custom_call.1} parent=1 // pred_check_branch
      %498 = sbr.rel (0) target = $region29
    $region28: #{tpu_custom_call.1} parent=1 // pred_region
      %s500 = ssub.s32 1024, 1024
      %501 = vsyncadd [#allocation5], %s500
      %s502 = sshll.u32 [#allocation8], 4
      %s503 = int_to_ptr.vmem [resolvable:$true] %s502
      %508 = dma.vmem_to_hbm [thread:$0]  %s503, 1024, %s2, [#allocation5], 64, 64, 4
    $region29: #{tpu_custom_call.1} parent=1 // pred_fallthru
      _
    // Predicated region
    $region30: #{tpu_custom_call.1} parent=1 // pred_check
      _
    $region31: #{tpu_custom_call.1} parent=1 // pred_check_branch
      %510 = sbr.rel (0) target = $region33
    $region32: #{tpu_custom_call.1} parent=1 // pred_region
      %s512 = ssub.s32 128, 128
      %513 = vsyncadd [#allocation10], %s512
      %s515 = sshll.u32 [#allocation9], 4
      %s516 = int_to_ptr.vmem [resolvable:$true] %s515
      %518 = dma.vmem_to_hbm [thread:$0]  %s516, 128, %s3, [#allocation10]
    $region33: #{tpu_custom_call.1} parent=1 // pred_fallthru
      _
    // Predicated region
    $region34: #{tpu_custom_call.1} parent=1 // pred_check
      _
    $region35: #{tpu_custom_call.1} parent=1 // pred_check_branch
      %520 = sbr.rel (0) target = $region37
    $region36: #{tpu_custom_call.1} parent=1 // pred_region
      %s522 = ssub.s32 128, 128
      %523 = vsyncadd [#allocation10], %s522
      %s525 = sshll.u32 [#allocation11], 4
      %s526 = int_to_ptr.vmem [resolvable:$true] %s525
      %528 = dma.vmem_to_hbm [thread:$0]  %s526, 128, %s4, [#allocation10]
    $region37: #{tpu_custom_call.1} parent=1 // pred_fallthru
      _
    // Predicated region
    $region38: #{tpu_custom_call.1} parent=1 // pred_check
      _
    $region39: #{tpu_custom_call.1} parent=1 // pred_check_branch
      %530 = sbr.rel (0) target = $region41
    $region40: #{tpu_custom_call.1} parent=1 // pred_region
      %531 = dma.done [#allocation5], 1024
    $region41: #{tpu_custom_call.1} parent=1 // pred_fallthru
      _
    // Predicated region
    $region42: #{tpu_custom_call.1} parent=1 // pred_check
      _
    $region43: #{tpu_custom_call.1} parent=1 // pred_check_branch
      %533 = sbr.rel (0) target = $region45
    $region44: #{tpu_custom_call.1} parent=1 // pred_region
      %534 = dma.done [#allocation10], 128
    $region45: #{tpu_custom_call.1} parent=1 // pred_fallthru
      _
    // Predicated region
    $region46: #{tpu_custom_call.1} parent=1 // pred_check
      _
    $region47: #{tpu_custom_call.1} parent=1 // pred_check_branch
      %536 = sbr.rel (0) target = $region49
    $region48: #{tpu_custom_call.1} parent=1 // pred_region
      %537 = dma.done [#allocation10], 128
    $region49: #{tpu_custom_call.1} parent=1 // pred_fallthru
      _
    %538 = vsyncpa [#allocation4], 1
    %539 = vsyncpa [#allocation7], 1
    %540 = vsyncpa [#allocation5], 1
    %541 = vsyncpa [#allocation10], 1

</llo_original>
